<compile_context>
chip_gen: v6e
topology: v6e:2x2x1
jax: 0.10.0
libtpu: 0.0.40
codegen_flags: <defaults>
</compile_context>

<pallas_src>
import numpy as np
import jax
import jax.numpy as jnp
from jax.experimental import pallas as pl
from jax.experimental.pallas import tpu as pltpu

BANHEN = 3
BANSIZE = BANHEN * BANHEN        # 9
CH = 10
FEAT = BANSIZE * CH              # 90
IN_FEAT = BANSIZE * 3            # 27
LANES = 128
OUT_W = 16                       # lane-width of the HBM output slab (>= 10 used lanes)
SUBLANE = 16                     # bf16 sublane granularity for the batch tile
EPS = 1e-5


# ----------------------------------------------------------------------------
# deterministic parameter construction (synthetic, no checkpoint load)
# ----------------------------------------------------------------------------
def make_params(key):
    params = {}

    def nxt():
        nonlocal key
        key, sub = jax.random.split(key)
        return sub

    def conv_init(cin, cout):
        fan_in = cin * 9
        w = jax.random.normal(nxt(), (cout, cin, 3, 3), jnp.float32) / np.sqrt(fan_in)
        b = jax.random.normal(nxt(), (cout,), jnp.float32) * 0.1
        return w, b

    def bn_init(c):
        gamma = jax.random.uniform(nxt(), (c,), jnp.float32, minval=0.5, maxval=1.5)
        beta = jax.random.normal(nxt(), (c,), jnp.float32) * 0.1
        mean = jax.random.normal(nxt(), (c,), jnp.float32) * 0.1
        var = jax.random.uniform(nxt(), (c,), jnp.float32, minval=0.5, maxval=1.5)
        return gamma, beta, mean, var

    def linear_init(cin, cout):
        w = jax.random.normal(nxt(), (cout, cin), jnp.float32) / np.sqrt(cin)
        b = jax.random.normal(nxt(), (cout,), jnp.float32) * 0.1
        return w, b

    params["conv1"] = conv_init(3, CH)
    for l in range(2, 8):
        params[f"conv{l}"] = conv_init(CH, CH)
    for l in range(1, 8):
        params[f"bn{l}"] = bn_init(CH)
    params["conv_p1"] = conv_init(CH, 1)
    params["bn_p1"] = bn_init(1)
    params["conv_v1"] = conv_init(CH, 1)
    params["bn_v1"] = bn_init(1)
    params["fc_v2"] = linear_init(BANSIZE, BANSIZE)
    params["fc_v3"] = linear_init(BANSIZE, 1)
    return params


# ----------------------------------------------------------------------------
# host-side glue: lower convs to dense matrices, fold BN, pack + pad to 128 lanes
# ----------------------------------------------------------------------------
def _conv_to_matrix(w):
    """w: (Cout, Cin, 3, 3) torch layout -> A: (9*Cin, 9*Cout), y_vec = x_vec @ A.
    Rows indexed q*Cin + c (NHWC-flat input), cols p*Cout + c (NHWC-flat output)."""
    w = np.asarray(w, np.float32)
    cout, cin = w.shape[0], w.shape[1]
    A = np.zeros((9 * cin, 9 * cout), np.float32)
    for pi in range(3):
        for pj in range(3):
            p = pi * 3 + pj
            for kh in range(3):
                for kw in range(3):
                    qi, qj = pi + kh - 1, pj + kw - 1
                    if 0 <= qi < 3 and 0 <= qj < 3:
                        q = qi * 3 + qj
                        A[q * cin:(q + 1) * cin, p * cout:(p + 1) * cout] = w[:, :, kh, kw].T
    return A


def _fold_bn(bias, bn):
    """Per-column (scale, shift) so conv+bias+BN = (x_vec @ A) * scale + shift."""
    gamma, beta, mean, var = (np.asarray(a, np.float32) for a in bn)
    s = gamma / np.sqrt(var + EPS)
    t = beta - mean * s
    scale = np.tile(s, BANSIZE)                              # col p*Cout+c -> s[c]
    shift = np.tile(np.asarray(bias, np.float32) * s + t, BANSIZE)
    return scale, shift


def build_packed_ops(params):
    """Returns (a1, W, T) in float32:
       a1: (27,128)      first conv (BN-scale folded, rows in NCHW-flat order)
       W : (9,128,128)   [conv2..conv7, fused head, fc_v2, fc_v3] lane-padded
       T : (10,128)      shift vectors for the 10 matmul stages."""
    shifts = np.zeros((10, LANES), np.float32)

    # --- layer 1: fold BN scale into matrix; fold NCHW->NHWC perm into rows ---
    w1, b1 = params["conv1"]
    A1 = _conv_to_matrix(w1)                                 # (27, 90), rows q*3+c
    sc, sh = _fold_bn(b1, params["bn1"])
    A1 = A1 * sc[None, :]
    perm = np.arange(9 * 3).reshape(9, 3).T.reshape(-1)      # new row c*9+q -> old q*3+c
    A1 = A1[perm]                                            # rows now NCHW-flat order
    a1 = np.zeros((IN_FEAT, LANES), np.float32)
    a1[:, :FEAT] = A1
    shifts[0, :FEAT] = sh

    mats = []
    # --- layers 2..7 ---
    for l in range(2, 8):
        wl, bl = params[f"conv{l}"]
        A = _conv_to_matrix(wl)                              # (90, 90)
        sc, sh = _fold_bn(bl, params[f"bn{l}"])
        Ap = np.zeros((LANES, LANES), np.float32)
        Ap[:FEAT, :FEAT] = A * sc[None, :]
        mats.append(Ap)
        shifts[l - 1, :FEAT] = sh

    # --- fused head: policy conv -> lanes 0:9, value conv -> lanes 9:18 ---
    Ah = np.zeros((LANES, LANES), np.float32)
    wp, bp = params["conv_p1"]
    sc_p, sh_p = _fold_bn(bp, params["bn_p1"])
    Ah[:FEAT, 0:BANSIZE] = _conv_to_matrix(wp) * sc_p[None, :]
    wv, bv = params["conv_v1"]
    sc_v, sh_v = _fold_bn(bv, params["bn_v1"])
    Ah[:FEAT, BANSIZE:2 * BANSIZE] = _conv_to_matrix(wv) * sc_v[None, :]
    mats.append(Ah)
    shifts[7, 0:BANSIZE] = sh_p
    shifts[7, BANSIZE:2 * BANSIZE] = sh_v

    # --- fc_v2: reads value features from lanes 9:18, writes to lanes 0:9 ---
    W2 = np.zeros((LANES, LANES), np.float32)
    wv2, bv2 = params["fc_v2"]
    W2[BANSIZE:2 * BANSIZE, 0:BANSIZE] = np.asarray(wv2, np.float32).T
    mats.append(W2)
    shifts[8, 0:BANSIZE] = np.asarray(bv2, np.float32)

    # --- fc_v3: reads lanes 0:9, writes the scalar value to lane 9 ---
    W3 = np.zeros((LANES, LANES), np.float32)
    wv3, bv3 = params["fc_v3"]
    W3[0:BANSIZE, BANSIZE] = np.asarray(wv3, np.float32)[0, :]
    mats.append(W3)
    shifts[9, BANSIZE] = np.asarray(bv3, np.float32)[0]

    W = np.stack(mats, axis=0)                               # (9, 128, 128)
    return jnp.asarray(a1), jnp.asarray(W), jnp.asarray(shifts)


# ----------------------------------------------------------------------------
# shared forward chain (used by the Pallas kernel AND the XLA mirror reference)
# ----------------------------------------------------------------------------
def _packed_chain(x, a1, w_get, t, dot, act_dtype):
    """x:(TB,27)  a1:(27,128)  w_get(l)->(128,128)  t:(10,128)  dot(h,m)->(TB,128) f32.
    Activations (including residual carries) are held in act_dtype (bf16 in kernel)."""
    relu_a = lambda y: jnp.maximum(y, 0.0).astype(act_dtype)
    f32 = jnp.float32

    h1 = relu_a(dot(x, a1) + t[0:1])
    h2 = relu_a(dot(h1, w_get(0)) + t[1:2])
    h3 = relu_a(dot(h2, w_get(1)) + t[2:3] + h1.astype(f32))
    h4 = relu_a(dot(h3, w_get(2)) + t[3:4])
    h5 = relu_a(dot(h4, w_get(3)) + t[4:5] + h3.astype(f32))
    h6 = relu_a(dot(h5, w_get(4)) + t[5:6])
    h7 = relu_a(dot(h6, w_get(5)) + t[6:7] + h5.astype(f32))

    head = dot(h7, w_get(6)) + t[7:8]            # policy pre-clip in 0:9, value-conv in 9:18
    p = jnp.clip(head, -1.0, 1.0)                # Hardtanh (policy lanes)
    vh = relu_a(head)                            # relu(bn_v1(conv_v1)) lives in lanes 9:18
    v2 = relu_a(dot(vh, w_get(7)) + t[8:9])      # fc_v2 -> lanes 0:9
    v3 = jnp.tanh(dot(v2, w_get(8)) + t[9:10])   # fc_v3 -> lane 9; tanh(0)=0 elsewhere

    lane = jax.lax.broadcasted_iota(jnp.int32, p.shape, 1)
    return jnp.where(lane < BANSIZE, p, v3)      # cols 0:9 = policy, col 9 = value, rest 0


# ----------------------------------------------------------------------------
# Pallas kernel + wrapper
# ----------------------------------------------------------------------------
def _net_kernel(x_ref, a1_ref, w_ref, t_ref, out_ref):
    # Operands already bf16; MXU does bf16 x bf16 -> f32 accumulation.
    dot = lambda h, m: jnp.dot(h, m, preferred_element_type=jnp.float32)
    res = _packed_chain(x_ref[...], a1_ref[...], lambda l: w_ref[l],
                        t_ref[...], dot, jnp.bfloat16)        # (TB, 128) f32
    out_ref[...] = res[:, :OUT_W]                             # narrow writeback slab


def _round_up(n, m):
    return ((n + m - 1) // m) * m


def neuralnet_cnn_forward(x_nchw, packed, *, tb=2048):
    """x_nchw: (B, 3, 3, 3) float32.  Returns (policy (B,9), value (B,1))."""
    a1, w, t = packed
    B = x_nchw.shape[0]
    # NCHW flatten only (the permutation is folded into a1's rows); bf16 halves input DMA.
    x_flat = x_nchw.reshape(B, IN_FEAT).astype(jnp.bfloat16)

    # Batch tile: multiple of 16 (bf16 sublanes).  Cap at ceil(B/2) so the grid has
    # >= 2 tiles whenever possible (v7x megacore sharding via "parallel").
    tb = max(_round_up(int(tb), SUBLANE), SUBLANE)
    b_pad = _round_up(B, SUBLANE)
    half = _round_up(pl.cdiv(b_pad, 2), SUBLANE)
    TB = max(min(tb, half), SUBLANE)
    Bp = _round_up(B, TB)
    if Bp != B:
        x_flat = jnp.pad(x_flat, ((0, Bp - B), (0, 0)))

    a1_bf = a1.astype(jnp.bfloat16)
    w_bf = w.astype(jnp.bfloat16)

    out = pl.pallas_call(
        _net_kernel,
        out_shape=jax.ShapeDtypeStruct((Bp, OUT_W), jnp.float32),
        grid=(Bp // TB,),
        in_specs=[
            pl.BlockSpec((TB, IN_FEAT), lambda i: (i, 0)),          # batch-tiled bf16 input
            pl.BlockSpec((IN_FEAT, LANES), lambda i: (0, 0)),       # resident weights
            pl.BlockSpec((9, LANES, LANES), lambda i: (0, 0, 0)),   # resident weight slab
            pl.BlockSpec((10, LANES), lambda i: (0, 0)),            # resident shifts
        ],
        out_specs=pl.BlockSpec((TB, OUT_W), lambda i: (i, 0)),      # 16-lane f32 writeback
        compiler_params=pltpu.CompilerParams(
            dimension_semantics=("parallel",),
            vmem_limit_bytes=32 * 1024 * 1024),                     # safe big-tile on v5e
    )(x_flat, a1_bf, w_bf, t)

    return out[:B, :BANSIZE], out[:B, BANSIZE:BANSIZE + 1]


# ----------------------------------------------------------------------------
# XLA references for correctness checks
# ----------------------------------------------------------------------------
def packed_reference_forward(x_nchw, packed, *, bf16):
    """Same packed/folded math as the kernel, run in plain XLA.
    bf16=True mirrors the kernel (bf16 operands/activations, f32 accumulation);
    bf16=False is f32 HIGHEST for checking the lowering itself."""
    a1, w, t = packed
    B = x_nchw.shape[0]
    x_flat = x_nchw.reshape(B, IN_FEAT).astype(jnp.float32)
    if bf16:
        x_flat = x_flat.astype(jnp.bfloat16)
        a1 = a1.astype(jnp.bfloat16)
        w = w.astype(jnp.bfloat16)
        dot = lambda h, m: jnp.dot(h, m, preferred_element_type=jnp.float32)
        act = jnp.bfloat16
    else:
        dot = lambda h, m: jnp.dot(h, m, precision=jax.lax.Precision.HIGHEST)
        act = jnp.float32
    out = _packed_chain(x_flat, a1, lambda l: w[l], t, dot, act)
    return out[:, :BANSIZE], out[:, BANSIZE:BANSIZE + 1]


def reference_forward(x, params):
    """Direct NCHW conv reference (f32 HIGHEST) mirroring the PyTorch module."""
    HIGHEST = jax.lax.Precision.HIGHEST

    def conv(x, wb):
        w, b = wb
        y = jax.lax.conv_general_dilated(
            x, w, (1, 1), ((1, 1), (1, 1)),
            dimension_numbers=("NCHW", "OIHW", "NCHW"), precision=HIGHEST)
        return y + b[None, :, None, None]

    def bn(x, p):
        g, be, m, v = p
        s = g / jnp.sqrt(v + EPS)
        return (x - m[None, :, None, None]) * s[None, :, None, None] + be[None, :, None, None]

    relu = jax.nn.relu
    o1 = relu(bn(conv(x, params["conv1"]), params["bn1"]))
    o2 = relu(bn(conv(o1, params["conv2"]), params["bn2"]))
    o3 = relu(bn(conv(o2, params["conv3"]), params["bn3"]) + o1)
    o4 = relu(bn(conv(o3, params["conv4"]), params["bn4"]))
    o5 = relu(bn(conv(o4, params["conv5"]), params["bn5"]) + o3)
    o6 = relu(bn(conv(o5, params["conv6"]), params["bn6"]))
    o7 = relu(bn(conv(o6, params["conv7"]), params["bn7"]) + o5)

    p1 = bn(conv(o7, params["conv_p1"]), params["bn_p1"]).reshape(x.shape[0], -1)
    out_p = jnp.clip(p1, -1.0, 1.0)

    v1 = relu(bn(conv(o7, params["conv_v1"]), params["bn_v1"])).reshape(-1, BANSIZE)
    wv2, bv2 = params["fc_v2"]
    wv3, bv3 = params["fc_v3"]
    v2 = relu(jnp.dot(v1, wv2.T, precision=HIGHEST) + bv2)
    out_v = jnp.tanh(jnp.dot(v2, wv3.T, precision=HIGHEST) + bv3)
    return out_p, out_v


if __name__ == "__main__":
    key = jax.random.PRNGKey(0)
    key, pkey, xkey, xkey2 = jax.random.split(key, 4)
    params = make_params(pkey)
    packed = build_packed_ops(params)

    # --- small batch, shapes consistent with the module ---
    B = 2
    x = jax.random.normal(xkey, (B, 3, BANHEN, BANHEN), jnp.float32)  # NCHW

    out_p, out_v = neuralnet_cnn_forward(x, packed)
    jax.block_until_ready((out_p, out_v))
    assert out_p.shape == (B, BANSIZE) and out_v.shape == (B, 1)

    # (1) kernel vs identical-math XLA chain (bf16 operands/activations, f32 accumulation)
    ref_p, ref_v = packed_reference_forward(x, packed, bf16=True)
    np.testing.assert_allclose(np.asarray(out_p), np.asarray(ref_p), rtol=5e-3, atol=5e-3)
    np.testing.assert_allclose(np.asarray(out_v), np.asarray(ref_v), rtol=5e-3, atol=5e-3)

    # (2) packed/folded lowering vs direct NCHW conv reference (both f32 HIGHEST)
    pp, pv = packed_reference_forward(x, packed, bf16=False)
    cp, cv = reference_forward(x, params)
    np.testing.assert_allclose(np.asarray(pp), np.asarray(cp), rtol=1e-4, atol=1e-4)
    np.testing.assert_allclose(np.asarray(pv), np.asarray(cv), rtol=1e-4, atol=1e-4)

    # (3) multi-tile grid path (batch tiling + tail padding): 100 rows, tb=32 -> 4 tiles
    B2 = 100
    x2 = jax.random.normal(xkey2, (B2, 3, BANHEN, BANHEN), jnp.float32)
    out_p2, out_v2 = neuralnet_cnn_forward(x2, packed, tb=32)
    jax.block_until_ready((out_p2, out_v2))
    ref_p2, ref_v2 = packed_reference_forward(x2, packed, bf16=True)
    np.testing.assert_allclose(np.asarray(out_p2), np.asarray(ref_p2), rtol=5e-3, atol=5e-3)
    np.testing.assert_allclose(np.asarray(out_v2), np.asarray(ref_v2), rtol=5e-3, atol=5e-3)

    # (3b) default tile path on the same batch: TB capped at ceil(B/2) -> 2 tiles
    out_p3, out_v3 = neuralnet_cnn_forward(x2, packed)
    jax.block_until_ready((out_p3, out_v3))
    np.testing.assert_allclose(np.asarray(out_p3), np.asarray(ref_p2), rtol=5e-3, atol=5e-3)
    np.testing.assert_allclose(np.asarray(out_v3), np.asarray(ref_v2), rtol=5e-3, atol=5e-3)

    # (4) odd / non-multiple-of-8 user tile is rounded up safely (correctness-review fix)
    out_p4, out_v4 = neuralnet_cnn_forward(x2, packed, tb=100)
    jax.block_until_ready((out_p4, out_v4))
    np.testing.assert_allclose(np.asarray(out_p4), np.asarray(ref_p2), rtol=5e-3, atol=5e-3)
    np.testing.assert_allclose(np.asarray(out_v4), np.asarray(ref_v2), rtol=5e-3, atol=5e-3)

    print("KERNEL_OK")
</pallas_src>

<mosaic_0001>
module attributes {stable_mosaic.version = 11 : i64} {
  func.func @_net_kernel(%arg0: i32, %arg1: memref<16x27xbf16, #tpu.memory_space<vmem>>, %arg2: memref<27x128xbf16, #tpu.memory_space<vmem>>, %arg3: memref<9x128x128xbf16, #tpu.memory_space<vmem>>, %arg4: memref<10x128xf32, #tpu.memory_space<vmem>>, %arg5: memref<16x16xf32, #tpu.memory_space<vmem>>) attributes {dimension_semantics = [#tpu.dimension_semantics<parallel>], iteration_bounds = array<i64: 1>, scalar_prefetch = 0 : i64, scratch_operands = 0 : i64, tpu.core_type = #tpu.core_type<tc>, window_params = [{transform_indices = @transform_0, window_bounds = array<i64: 16, 27>}, {pipeline_mode = #tpu.pipeline_mode<synchronous>, transform_indices = @transform_1, window_bounds = array<i64: 27, 128>}, {pipeline_mode = #tpu.pipeline_mode<synchronous>, transform_indices = @transform_2, window_bounds = array<i64: 9, 128, 128>}, {pipeline_mode = #tpu.pipeline_mode<synchronous>, transform_indices = @transform_3, window_bounds = array<i64: 10, 128>}, {transform_indices = @transform_4, window_bounds = array<i64: 16, 16>}]} {
    %c0 = arith.constant 0 : index
    %c0_0 = arith.constant 0 : index
    %0 = vector.load %arg1[%c0, %c0_0] : memref<16x27xbf16, #tpu.memory_space<vmem>>, vector<16x27xbf16>
    %c0_1 = arith.constant 0 : index
    %c0_2 = arith.constant 0 : index
    %1 = vector.load %arg2[%c0_1, %c0_2] : memref<27x128xbf16, #tpu.memory_space<vmem>>, vector<27x128xbf16>
    %c0_3 = arith.constant 0 : index
    %c0_4 = arith.constant 0 : index
    %2 = vector.load %arg4[%c0_3, %c0_4] : memref<10x128xf32, #tpu.memory_space<vmem>>, vector<10x128xf32>
    %cst = arith.constant dense<0.000000e+00> : vector<16x128xf32>
    %3 = tpu.matmul %0, %1, %cst {dimension_numbers = #tpu.dot_dimension_numbers<[1], [0], [0], [1], [0, 0, 1, 1], [], []>} : vector<16x27xbf16>, vector<27x128xbf16>, vector<16x128xf32> -> vector<16x128xf32>
    %4 = vector.extract_strided_slice %2 {offsets = [0, 0], sizes = [1, 128], strides = [1, 1]} : vector<10x128xf32> to vector<1x128xf32>
    %5 = vector.broadcast %4 : vector<1x128xf32> to vector<16x128xf32>
    %6 = arith.addf %3, %5 : vector<16x128xf32>
    %cst_5 = arith.constant 0.000000e+00 : f32
    %7 = vector.broadcast %cst_5 : f32 to vector<16x128xf32>
    %8 = arith.maximumf %6, %7 : vector<16x128xf32>
    %9 = arith.truncf %8 : vector<16x128xf32> to vector<16x128xbf16>
    %c0_6 = arith.constant 0 : index
    %c0_7 = arith.constant 0 : index
    %c0_8 = arith.constant 0 : index
    %10 = vector.load %arg3[%c0_6, %c0_7, %c0_8] : memref<9x128x128xbf16, #tpu.memory_space<vmem>>, vector<1x128x128xbf16>
    %11 = vector.shape_cast %10 : vector<1x128x128xbf16> to vector<128x128xbf16>
    %cst_9 = arith.constant dense<0.000000e+00> : vector<16x128xf32>
    %12 = tpu.matmul %9, %11, %cst_9 {dimension_numbers = #tpu.dot_dimension_numbers<[1], [0], [0], [1], [0, 0, 1, 1], [], []>} : vector<16x128xbf16>, vector<128x128xbf16>, vector<16x128xf32> -> vector<16x128xf32>
    %13 = vector.extract_strided_slice %2 {offsets = [1, 0], sizes = [1, 128], strides = [1, 1]} : vector<10x128xf32> to vector<1x128xf32>
    %14 = vector.broadcast %13 : vector<1x128xf32> to vector<16x128xf32>
    %15 = arith.addf %12, %14 : vector<16x128xf32>
    %cst_10 = arith.constant 0.000000e+00 : f32
    %16 = vector.broadcast %cst_10 : f32 to vector<16x128xf32>
    %17 = arith.maximumf %15, %16 : vector<16x128xf32>
    %18 = arith.truncf %17 : vector<16x128xf32> to vector<16x128xbf16>
    %c1 = arith.constant 1 : index
    %c0_11 = arith.constant 0 : index
    %c0_12 = arith.constant 0 : index
    %19 = vector.load %arg3[%c1, %c0_11, %c0_12] : memref<9x128x128xbf16, #tpu.memory_space<vmem>>, vector<1x128x128xbf16>
    %20 = vector.shape_cast %19 : vector<1x128x128xbf16> to vector<128x128xbf16>
    %cst_13 = arith.constant dense<0.000000e+00> : vector<16x128xf32>
    %21 = tpu.matmul %18, %20, %cst_13 {dimension_numbers = #tpu.dot_dimension_numbers<[1], [0], [0], [1], [0, 0, 1, 1], [], []>} : vector<16x128xbf16>, vector<128x128xbf16>, vector<16x128xf32> -> vector<16x128xf32>
    %22 = vector.extract_strided_slice %2 {offsets = [2, 0], sizes = [1, 128], strides = [1, 1]} : vector<10x128xf32> to vector<1x128xf32>
    %23 = vector.broadcast %22 : vector<1x128xf32> to vector<16x128xf32>
    %24 = arith.addf %21, %23 : vector<16x128xf32>
    %25 = arith.extf %9 : vector<16x128xbf16> to vector<16x128xf32>
    %26 = arith.addf %24, %25 : vector<16x128xf32>
    %cst_14 = arith.constant 0.000000e+00 : f32
    %27 = vector.broadcast %cst_14 : f32 to vector<16x128xf32>
    %28 = arith.maximumf %26, %27 : vector<16x128xf32>
    %29 = arith.truncf %28 : vector<16x128xf32> to vector<16x128xbf16>
    %c2 = arith.constant 2 : index
    %c0_15 = arith.constant 0 : index
    %c0_16 = arith.constant 0 : index
    %30 = vector.load %arg3[%c2, %c0_15, %c0_16] : memref<9x128x128xbf16, #tpu.memory_space<vmem>>, vector<1x128x128xbf16>
    %31 = vector.shape_cast %30 : vector<1x128x128xbf16> to vector<128x128xbf16>
    %cst_17 = arith.constant dense<0.000000e+00> : vector<16x128xf32>
    %32 = tpu.matmul %29, %31, %cst_17 {dimension_numbers = #tpu.dot_dimension_numbers<[1], [0], [0], [1], [0, 0, 1, 1], [], []>} : vector<16x128xbf16>, vector<128x128xbf16>, vector<16x128xf32> -> vector<16x128xf32>
    %33 = vector.extract_strided_slice %2 {offsets = [3, 0], sizes = [1, 128], strides = [1, 1]} : vector<10x128xf32> to vector<1x128xf32>
    %34 = vector.broadcast %33 : vector<1x128xf32> to vector<16x128xf32>
    %35 = arith.addf %32, %34 : vector<16x128xf32>
    %cst_18 = arith.constant 0.000000e+00 : f32
    %36 = vector.broadcast %cst_18 : f32 to vector<16x128xf32>
    %37 = arith.maximumf %35, %36 : vector<16x128xf32>
    %38 = arith.truncf %37 : vector<16x128xf32> to vector<16x128xbf16>
    %c3 = arith.constant 3 : index
    %c0_19 = arith.constant 0 : index
    %c0_20 = arith.constant 0 : index
    %39 = vector.load %arg3[%c3, %c0_19, %c0_20] : memref<9x128x128xbf16, #tpu.memory_space<vmem>>, vector<1x128x128xbf16>
    %40 = vector.shape_cast %39 : vector<1x128x128xbf16> to vector<128x128xbf16>
    %cst_21 = arith.constant dense<0.000000e+00> : vector<16x128xf32>
    %41 = tpu.matmul %38, %40, %cst_21 {dimension_numbers = #tpu.dot_dimension_numbers<[1], [0], [0], [1], [0, 0, 1, 1], [], []>} : vector<16x128xbf16>, vector<128x128xbf16>, vector<16x128xf32> -> vector<16x128xf32>
    %42 = vector.extract_strided_slice %2 {offsets = [4, 0], sizes = [1, 128], strides = [1, 1]} : vector<10x128xf32> to vector<1x128xf32>
    %43 = vector.broadcast %42 : vector<1x128xf32> to vector<16x128xf32>
    %44 = arith.addf %41, %43 : vector<16x128xf32>
    %45 = arith.extf %29 : vector<16x128xbf16> to vector<16x128xf32>
    %46 = arith.addf %44, %45 : vector<16x128xf32>
    %cst_22 = arith.constant 0.000000e+00 : f32
    %47 = vector.broadcast %cst_22 : f32 to vector<16x128xf32>
    %48 = arith.maximumf %46, %47 : vector<16x128xf32>
    %49 = arith.truncf %48 : vector<16x128xf32> to vector<16x128xbf16>
    %c4 = arith.constant 4 : index
    %c0_23 = arith.constant 0 : index
    %c0_24 = arith.constant 0 : index
    %50 = vector.load %arg3[%c4, %c0_23, %c0_24] : memref<9x128x128xbf16, #tpu.memory_space<vmem>>, vector<1x128x128xbf16>
    %51 = vector.shape_cast %50 : vector<1x128x128xbf16> to vector<128x128xbf16>
    %cst_25 = arith.constant dense<0.000000e+00> : vector<16x128xf32>
    %52 = tpu.matmul %49, %51, %cst_25 {dimension_numbers = #tpu.dot_dimension_numbers<[1], [0], [0], [1], [0, 0, 1, 1], [], []>} : vector<16x128xbf16>, vector<128x128xbf16>, vector<16x128xf32> -> vector<16x128xf32>
    %53 = vector.extract_strided_slice %2 {offsets = [5, 0], sizes = [1, 128], strides = [1, 1]} : vector<10x128xf32> to vector<1x128xf32>
    %54 = vector.broadcast %53 : vector<1x128xf32> to vector<16x128xf32>
    %55 = arith.addf %52, %54 : vector<16x128xf32>
    %cst_26 = arith.constant 0.000000e+00 : f32
    %56 = vector.broadcast %cst_26 : f32 to vector<16x128xf32>
    %57 = arith.maximumf %55, %56 : vector<16x128xf32>
    %58 = arith.truncf %57 : vector<16x128xf32> to vector<16x128xbf16>
    %c5 = arith.constant 5 : index
    %c0_27 = arith.constant 0 : index
    %c0_28 = arith.constant 0 : index
    %59 = vector.load %arg3[%c5, %c0_27, %c0_28] : memref<9x128x128xbf16, #tpu.memory_space<vmem>>, vector<1x128x128xbf16>
    %60 = vector.shape_cast %59 : vector<1x128x128xbf16> to vector<128x128xbf16>
    %cst_29 = arith.constant dense<0.000000e+00> : vector<16x128xf32>
    %61 = tpu.matmul %58, %60, %cst_29 {dimension_numbers = #tpu.dot_dimension_numbers<[1], [0], [0], [1], [0, 0, 1, 1], [], []>} : vector<16x128xbf16>, vector<128x128xbf16>, vector<16x128xf32> -> vector<16x128xf32>
    %62 = vector.extract_strided_slice %2 {offsets = [6, 0], sizes = [1, 128], strides = [1, 1]} : vector<10x128xf32> to vector<1x128xf32>
    %63 = vector.broadcast %62 : vector<1x128xf32> to vector<16x128xf32>
    %64 = arith.addf %61, %63 : vector<16x128xf32>
    %65 = arith.extf %49 : vector<16x128xbf16> to vector<16x128xf32>
    %66 = arith.addf %64, %65 : vector<16x128xf32>
    %cst_30 = arith.constant 0.000000e+00 : f32
    %67 = vector.broadcast %cst_30 : f32 to vector<16x128xf32>
    %68 = arith.maximumf %66, %67 : vector<16x128xf32>
    %69 = arith.truncf %68 : vector<16x128xf32> to vector<16x128xbf16>
    %c6 = arith.constant 6 : index
    %c0_31 = arith.constant 0 : index
    %c0_32 = arith.constant 0 : index
    %70 = vector.load %arg3[%c6, %c0_31, %c0_32] : memref<9x128x128xbf16, #tpu.memory_space<vmem>>, vector<1x128x128xbf16>
    %71 = vector.shape_cast %70 : vector<1x128x128xbf16> to vector<128x128xbf16>
    %cst_33 = arith.constant dense<0.000000e+00> : vector<16x128xf32>
    %72 = tpu.matmul %69, %71, %cst_33 {dimension_numbers = #tpu.dot_dimension_numbers<[1], [0], [0], [1], [0, 0, 1, 1], [], []>} : vector<16x128xbf16>, vector<128x128xbf16>, vector<16x128xf32> -> vector<16x128xf32>
    %73 = vector.extract_strided_slice %2 {offsets = [7, 0], sizes = [1, 128], strides = [1, 1]} : vector<10x128xf32> to vector<1x128xf32>
    %74 = vector.broadcast %73 : vector<1x128xf32> to vector<16x128xf32>
    %75 = arith.addf %72, %74 : vector<16x128xf32>
    %cst_34 = arith.constant -1.000000e+00 : f32
    %cst_35 = arith.constant 1.000000e+00 : f32
    %76 = vector.broadcast %cst_34 : f32 to vector<16x128xf32>
    %77 = arith.maximumf %76, %75 : vector<16x128xf32>
    %78 = vector.broadcast %cst_35 : f32 to vector<16x128xf32>
    %79 = arith.minimumf %78, %77 : vector<16x128xf32>
    %cst_36 = arith.constant 0.000000e+00 : f32
    %80 = vector.broadcast %cst_36 : f32 to vector<16x128xf32>
    %81 = arith.maximumf %75, %80 : vector<16x128xf32>
    %82 = arith.truncf %81 : vector<16x128xf32> to vector<16x128xbf16>
    %c7 = arith.constant 7 : index
    %c0_37 = arith.constant 0 : index
    %c0_38 = arith.constant 0 : index
    %83 = vector.load %arg3[%c7, %c0_37, %c0_38] : memref<9x128x128xbf16, #tpu.memory_space<vmem>>, vector<1x128x128xbf16>
    %84 = vector.shape_cast %83 : vector<1x128x128xbf16> to vector<128x128xbf16>
    %cst_39 = arith.constant dense<0.000000e+00> : vector<16x128xf32>
    %85 = tpu.matmul %82, %84, %cst_39 {dimension_numbers = #tpu.dot_dimension_numbers<[1], [0], [0], [1], [0, 0, 1, 1], [], []>} : vector<16x128xbf16>, vector<128x128xbf16>, vector<16x128xf32> -> vector<16x128xf32>
    %86 = vector.extract_strided_slice %2 {offsets = [8, 0], sizes = [1, 128], strides = [1, 1]} : vector<10x128xf32> to vector<1x128xf32>
    %87 = vector.broadcast %86 : vector<1x128xf32> to vector<16x128xf32>
    %88 = arith.addf %85, %87 : vector<16x128xf32>
    %cst_40 = arith.constant 0.000000e+00 : f32
    %89 = vector.broadcast %cst_40 : f32 to vector<16x128xf32>
    %90 = arith.maximumf %88, %89 : vector<16x128xf32>
    %91 = arith.truncf %90 : vector<16x128xf32> to vector<16x128xbf16>
    %c8 = arith.constant 8 : index
    %c0_41 = arith.constant 0 : index
    %c0_42 = arith.constant 0 : index
    %92 = vector.load %arg3[%c8, %c0_41, %c0_42] : memref<9x128x128xbf16, #tpu.memory_space<vmem>>, vector<1x128x128xbf16>
    %93 = vector.shape_cast %92 : vector<1x128x128xbf16> to vector<128x128xbf16>
    %cst_43 = arith.constant dense<0.000000e+00> : vector<16x128xf32>
    %94 = tpu.matmul %91, %93, %cst_43 {dimension_numbers = #tpu.dot_dimension_numbers<[1], [0], [0], [1], [0, 0, 1, 1], [], []>} : vector<16x128xbf16>, vector<128x128xbf16>, vector<16x128xf32> -> vector<16x128xf32>
    %95 = vector.extract_strided_slice %2 {offsets = [9, 0], sizes = [1, 128], strides = [1, 1]} : vector<10x128xf32> to vector<1x128xf32>
    %96 = vector.broadcast %95 : vector<1x128xf32> to vector<16x128xf32>
    %97 = arith.addf %94, %96 : vector<16x128xf32>
    %98 = math.tanh %97 : vector<16x128xf32>
    %99 = tpu.iota {dimensions = array<i32: 1>} : vector<16x128xi32>
    %c9_i32 = arith.constant 9 : i32
    %100 = vector.broadcast %c9_i32 : i32 to vector<16x128xi32>
    %101 = arith.cmpi slt, %99, %100 : vector<16x128xi32>
    %102 = arith.select %101, %79, %98 : vector<16x128xi1>, vector<16x128xf32>
    %103 = vector.extract_strided_slice %102 {offsets = [0, 0], sizes = [16, 16], strides = [1, 1]} : vector<16x128xf32> to vector<16x16xf32>
    %c0_44 = arith.constant 0 : index
    %c0_45 = arith.constant 0 : index
    %104 = vector.load %arg5[%c0_44, %c0_45] : memref<16x16xf32, #tpu.memory_space<vmem>>, vector<16x16xf32>
    tpu.vector_store %arg5[%c0_44, %c0_45], %103 {strides = array<i32>} : memref<16x16xf32, #tpu.memory_space<vmem>>, vector<16x16xf32>,
    return
  }
  func.func @transform_0(%arg0: i32) -> (i32, i32) {
    %c0_i32 = arith.constant 0 : i32
    %c0_i32_0 = arith.constant 0 : i32
    return %arg0, %c0_i32 : i32, i32
  }
  func.func @transform_1(%arg0: i32) -> (i32, i32) {
    %c0_i32 = arith.constant 0 : i32
    %c0_i32_0 = arith.constant 0 : i32
    %c0_i32_1 = arith.constant 0 : i32
    return %c0_i32, %c0_i32_0 : i32, i32
  }
  func.func @transform_2(%arg0: i32) -> (i32, i32, i32) {
    %c0_i32 = arith.constant 0 : i32
    %c0_i32_0 = arith.constant 0 : i32
    %c0_i32_1 = arith.constant 0 : i32
    %c0_i32_2 = arith.constant 0 : i32
    return %c0_i32, %c0_i32_0, %c0_i32_1 : i32, i32, i32
  }
  func.func @transform_3(%arg0: i32) -> (i32, i32) {
    %c0_i32 = arith.constant 0 : i32
    %c0_i32_0 = arith.constant 0 : i32
    %c0_i32_1 = arith.constant 0 : i32
    return %c0_i32, %c0_i32_0 : i32, i32
  }
  func.func @transform_4(%arg0: i32) -> (i32, i32) {
    %c0_i32 = arith.constant 0 : i32
    %c0_i32_0 = arith.constant 0 : i32
    return %arg0, %c0_i32 : i32, i32
  }
}

</mosaic_0001>

<llo_original>
// kernel: tpu_custom_call.1
$region0: #{tpu_custom_call.1}
  #allocation0 [shape = 'u32[]', space=smem, size = 0x4, offset = 0x4, fixed_abs, tag = 'smem constant byte address 0x4 - core index']
  #allocation1 [shape = 'u32[144,128]{1,0:T(1,128)}', space=vmem, size = 0x12000, scoped, tag = 'internal scratch']
  %s0 = inlined_call_operand.hbm [shape: bf16[16,27], index: 0, kind: input, shape index: {}]
  %s1 = inlined_call_operand.hbm [shape: bf16[27,128], index: 1, kind: input, shape index: {}]
  %s2 = inlined_call_operand.hbm [shape: bf16[9,128,128], index: 2, kind: input, shape index: {}]
  %s3 = inlined_call_operand.hbm [shape: f32[10,128], index: 3, kind: input, shape index: {}]
  %s4 = inlined_call_operand.hbm [shape: f32[16,16], index: 4, kind: output, shape index: {}]
  %s5 = sld [smem:[#allocation0]]
  $region42: #{tpu_custom_call.1} parent=0
    _
  %s7 = ssub.s32 1, %s5
  %s8 = scalar_select 0, %s7, %s5
  $region1: #{tpu_custom_call.1} parent=0
    #allocation2 [shape = 'u8[4096]{0}', space=vmem, size = 0x1000, scoped, tag = 'input window, operand 0, single buffered']
    #allocation3 [shape = 's32[1]{0}', space=sflag, size = 0x4, scoped, tag = 'scoped memory for tpu_custom_call.1']
    #allocation4 [shape = 's32[1]{0}', space=sflag, size = 0x4, scoped, tag = 'scoped memory for tpu_custom_call.1']
    #allocation5 [shape = 'u8[8192]{0}', space=vmem, size = 0x2000, scoped, tag = 'input window, operand 1, single buffered']
    #allocation6 [shape = 's32[1]{0}', space=sflag, size = 0x4, scoped, tag = 'scoped memory for tpu_custom_call.1']
    #allocation7 [shape = 'u8[294912]{0}', space=vmem, size = 0x48000, scoped, tag = 'input window, operand 2, single buffered']
    #allocation8 [shape = 'u8[8192]{0}', space=vmem, size = 0x2000, scoped, tag = 'input window, operand 3, single buffered']
    #allocation9 [shape = 's32[1]{0}', space=sflag, size = 0x4, scoped, tag = 'scoped memory for tpu_custom_call.1']
    #allocation10 [shape = 'u8[8192]{0}', space=vmem, size = 0x2000, scoped, tag = 'output window, operand 0, single buffered']
    %9 = vsyncpa [#allocation3], 0
    %10 = vsyncpa [#allocation6], 0
    %11 = vsyncpa [#allocation9], 0
    %12 = vsyncpa [#allocation4], 0
    // Predicated region
    $region2: #{tpu_custom_call.1} parent=1 // pred_check
      _
    $region3: #{tpu_custom_call.1} parent=1 // pred_check_branch
      %14 = sbr.rel (0) target = $region5
    $region4: #{tpu_custom_call.1} parent=1 // pred_region
      %s16 = ssub.s32 128, 128
      %17 = vsyncadd [#allocation3], %s16
      %s18 = sshll.u32 [#allocation2], 4
      %s19 = int_to_ptr.vmem [resolvable:$true] %s18
      %24 = dma.hbm_to_vmem [thread:$0]  %s0, 128, %s19, [#allocation3], 64, 64, 4
    $region5: #{tpu_custom_call.1} parent=1 // pred_fallthru
      _
    // Predicated region
    $region6: #{tpu_custom_call.1} parent=1 // pred_check
      _
    $region7: #{tpu_custom_call.1} parent=1 // pred_check_branch
      %26 = sbr.rel (0) target = $region9
    $region8: #{tpu_custom_call.1} parent=1 // pred_region
      %s28 = ssub.s32 256, 256
      %29 = vsyncadd [#allocation6], %s28
      %s30 = sshll.u32 [#allocation5], 4
      %s31 = int_to_ptr.vmem [resolvable:$true] %s30
      %36 = dma.hbm_to_vmem [thread:$0]  %s1, 256, %s31, [#allocation6], 64, 64, 4
    $region9: #{tpu_custom_call.1} parent=1 // pred_fallthru
      _
    // Predicated region
    $region10: #{tpu_custom_call.1} parent=1 // pred_check
      _
    $region11: #{tpu_custom_call.1} parent=1 // pred_check_branch
      %38 = sbr.rel (0) target = $region13
    $region12: #{tpu_custom_call.1} parent=1 // pred_region
      %s40 = ssub.s32 9216, 9216
      %41 = vsyncadd [#allocation6], %s40
      %s42 = sshll.u32 [#allocation7], 4
      %s43 = int_to_ptr.vmem [resolvable:$true] %s42
      %48 = dma.hbm_to_vmem [thread:$0]  %s2, 9216, %s43, [#allocation6], 64, 64, 4
    $region13: #{tpu_custom_call.1} parent=1 // pred_fallthru
      _
    // Predicated region
    $region14: #{tpu_custom_call.1} parent=1 // pred_check
      _
    $region15: #{tpu_custom_call.1} parent=1 // pred_check_branch
      %50 = sbr.rel (0) target = $region17
    $region16: #{tpu_custom_call.1} parent=1 // pred_region
      %s52 = ssub.s32 256, 256
      %53 = vsyncadd [#allocation9], %s52
      %s54 = sshll.u32 [#allocation8], 4
      %s55 = int_to_ptr.vmem [resolvable:$true] %s54
      %60 = dma.hbm_to_vmem [thread:$0]  %s3, 256, %s55, [#allocation9], 128, 128, 8
    $region17: #{tpu_custom_call.1} parent=1 // pred_fallthru
      _
    // Predicated region
    $region18: #{tpu_custom_call.1} parent=1 // pred_check
      _
    $region19: #{tpu_custom_call.1} parent=1 // pred_check_branch
      %62 = sbr.rel (0) target = $region21
    $region20: #{tpu_custom_call.1} parent=1 // pred_region
      %63 = dma.done [#allocation3], 128
    $region21: #{tpu_custom_call.1} parent=1 // pred_fallthru
      _
    // Predicated region
    $region22: #{tpu_custom_call.1} parent=1 // pred_check
      _
    $region23: #{tpu_custom_call.1} parent=1 // pred_check_branch
      %65 = sbr.rel (0) target = $region25
    $region24: #{tpu_custom_call.1} parent=1 // pred_region
      %66 = dma.done [#allocation6], 256
    $region25: #{tpu_custom_call.1} parent=1 // pred_fallthru
      _
    // Predicated region
    $region26: #{tpu_custom_call.1} parent=1 // pred_check
      _
    $region27: #{tpu_custom_call.1} parent=1 // pred_check_branch
      %68 = sbr.rel (0) target = $region29
    $region28: #{tpu_custom_call.1} parent=1 // pred_region
      %69 = dma.done [#allocation6], 9216
    $region29: #{tpu_custom_call.1} parent=1 // pred_fallthru
      _
    // Predicated region
    $region30: #{tpu_custom_call.1} parent=1 // pred_check
      _
    $region31: #{tpu_custom_call.1} parent=1 // pred_check_branch
      %71 = sbr.rel (0) target = $region33
    $region32: #{tpu_custom_call.1} parent=1 // pred_region
      %72 = dma.done [#allocation9], 256
    $region33: #{tpu_custom_call.1} parent=1 // pred_fallthru
      _
    %v74 = vld [vmem:[#allocation2] sm:$0xf]
    %v75 = vld [vmem:[#allocation2 + $0x4] sm:$0xf]
    %v76 = vld [vmem:[#allocation5] sm:$0xf]
    %v77 = vld [vmem:[#allocation5 + $0x4] sm:$0xf]
    %v78 = vld [vmem:[#allocation5 + $0x8] sm:$0xf]
    %v79 = vld [vmem:[#allocation5 + $0xc] sm:$0x3]
    %v80 = vld [vmem:[#allocation8] sm:$0xff]
    %v81 = vld [vmem:[#allocation8 + $0x8] sm:$0x3]
    %v82 = vlaneseq
    %v83 = vshrl.u32 %v82, 7
    %v84 = vsub.s32 0, %v83
    %v85 = vrot.slane %v80, %v84
    %v88 = vunpack.c.l.b16 %v74
    %v89 = vunpack.c.l.b16 %v75
    %v90 = vpack.c.b16 %v89, %v88
    %v95 = vunpack.c.l.b16 %v76
    %v96 = vunpack.c.l.b16 %v77
    %v97 = vunpack.c.l.b16 %v78
    %v98 = vunpack.c.l.b16 %v79
    %v99 = vpack.c.b16 %v96, %v95
    %v100 = vpack.c.b16 %v98, %v97
    %vm102 = vcmask 220160
    %v104 = vsel %vm102, %v90, 0
    %vm106 = vcmask 1044480
    %vm107 = vcmask 1045504
    %v108 = vsel %vm106, 4294967295, 65535
    %v109 = vsel %vm107, %v108, 0
    %v111 = vand.u32 %v100, %v109
    %113 = vmatprep.subr.bf16.mxu0 0
    %114 = vmatpush1.bf16.msra.mxu0 0
    %115 = vmatprep.subr.bf16.mxu0 0
    %116 = vmatpush1.bf16.msra.mxu0 0
    %117 = vmatprep.subr.bf16.mxu0 0
    %118 = vmatpush1.bf16.msra.mxu0 0
    %119 = vmatprep.subr.bf16.mxu0 0
    %120 = vmatpush1.bf16.msra.mxu0 0
    %121 = vmatprep.subr.bf16.mxu0 0
    %122 = vmatpush1.bf16.msra.mxu0 0
    %123 = vmatprep.subr.bf16.mxu0 0
    %124 = vmatpush1.bf16.msra.mxu0 0
    %125 = vmatprep.subr.bf16.mxu0 0
    %126 = vmatpush1.bf16.msra.mxu0 %v111
    %127 = vmatprep.subr.bf16.mxu0 0
    %128 = vmatpush1.bf16.msra.mxu0 %v99
    %129 = vmatprep.subr.bf16.mxu0 0
    %130 = vmatpush2.bf16.msra.mxu0 0
    %131 = vmatprep.subr.bf16.mxu0 0
    %132 = vmatpush2.bf16.msra.mxu0 0
    %133 = vmatprep.subr.bf16.mxu0 0
    %134 = vmatpush2.bf16.msra.mxu0 0
    %135 = vmatprep.subr.bf16.mxu0 0
    %136 = vmatpush2.bf16.msra.mxu0 0
    %137 = vmatprep.subr.bf16.mxu0 0
    %138 = vmatpush2.bf16.msra.mxu0 0
    %139 = vmatprep.subr.bf16.mxu0 0
    %140 = vmatpush2.bf16.msra.mxu0 0
    %141 = vmatprep.subr.bf16.mxu0 0
    %142 = vmatpush2.bf16.msra.mxu0 0
    %143 = vmatprep.subr.bf16.mxu0 0
    %144 = vmatpush2.bf16.msra.mxu0 0
    %145 = vmatprep.mubr.bf16.mxu0 0
    %146 = vmatmul.mubr.bf16.gmra.mxu0 %v104
    %v147 = vpop.f32.mrf.mxu0
    %v148 = vadd.f32 %v85, %v147
    %v149 = vpop.f32.mrf.mxu0
    %v150 = vpop.f32.mrf.mxu0
    %v151 = vadd.f32 %v85, %v150
    %v152 = vpop.f32.mrf.mxu0
    %153 = vdwg.mxu0
    %v154 = vmax.f32 %v148, 0.0
    %v155 = vmax.f32 %v151, 0.0
    %v156 = vpack.c.bf16 %v155, %v154
    %v157 = vld [vmem:[#allocation7] sm:$0xf]
    %v158 = vld [vmem:[#allocation7 + $0x4] sm:$0xf]
    %v159 = vld [vmem:[#allocation7 + $0x8] sm:$0xf]
    %v160 = vld [vmem:[#allocation7 + $0xc] sm:$0xf]
    %v161 = vld [vmem:[#allocation7 + $0x10] sm:$0xf]
    %v162 = vld [vmem:[#allocation7 + $0x14] sm:$0xf]
    %v163 = vld [vmem:[#allocation7 + $0x18] sm:$0xf]
    %v164 = vld [vmem:[#allocation7 + $0x1c] sm:$0xf]
    %v165 = vld [vmem:[#allocation7 + $0x20] sm:$0xf]
    %v166 = vld [vmem:[#allocation7 + $0x24] sm:$0xf]
    %v167 = vld [vmem:[#allocation7 + $0x28] sm:$0xf]
    %v168 = vld [vmem:[#allocation7 + $0x2c] sm:$0xf]
    %v169 = vld [vmem:[#allocation7 + $0x30] sm:$0xf]
    %v170 = vld [vmem:[#allocation7 + $0x34] sm:$0xf]
    %v171 = vld [vmem:[#allocation7 + $0x38] sm:$0xf]
    %v172 = vld [vmem:[#allocation7 + $0x3c] sm:$0xf]
    %v173 = vlaneseq
    %v174 = vshrl.u32 %v173, 7
    %v175 = vsub.s32 1, %v174
    %v176 = vrot.slane %v80, %v175
    %v193 = vunpack.c.l.b16 %v157
    %v194 = vunpack.c.l.b16 %v158
    %v195 = vunpack.c.l.b16 %v159
    %v196 = vunpack.c.l.b16 %v160
    %v197 = vunpack.c.l.b16 %v161
    %v198 = vunpack.c.l.b16 %v162
    %v199 = vunpack.c.l.b16 %v163
    %v200 = vunpack.c.l.b16 %v164
    %v201 = vunpack.c.l.b16 %v165
    %v202 = vunpack.c.l.b16 %v166
    %v203 = vunpack.c.l.b16 %v167
    %v204 = vunpack.c.l.b16 %v168
    %v205 = vunpack.c.l.b16 %v169
    %v206 = vunpack.c.l.b16 %v170
    %v207 = vunpack.c.l.b16 %v171
    %v208 = vunpack.c.l.b16 %v172
    %v209 = vpack.c.b16 %v194, %v193
    %v210 = vpack.c.b16 %v196, %v195
    %v211 = vpack.c.b16 %v198, %v197
    %v212 = vpack.c.b16 %v200, %v199
    %v213 = vpack.c.b16 %v202, %v201
    %v214 = vpack.c.b16 %v204, %v203
    %v215 = vpack.c.b16 %v206, %v205
    %v216 = vpack.c.b16 %v208, %v207
    %225 = vmatprep.subr.bf16.mxu0 0
    %226 = vmatpush1.bf16.msra.mxu0 %v216
    %227 = vmatprep.subr.bf16.mxu0 0
    %228 = vmatpush1.bf16.msra.mxu0 %v215
    %229 = vmatprep.subr.bf16.mxu0 0
    %230 = vmatpush1.bf16.msra.mxu0 %v214
    %231 = vmatprep.subr.bf16.mxu0 0
    %232 = vmatpush1.bf16.msra.mxu0 %v213
    %233 = vmatprep.subr.bf16.mxu0 0
    %234 = vmatpush1.bf16.msra.mxu0 %v212
    %235 = vmatprep.subr.bf16.mxu0 0
    %236 = vmatpush1.bf16.msra.mxu0 %v211
    %237 = vmatprep.subr.bf16.mxu0 0
    %238 = vmatpush1.bf16.msra.mxu0 %v210
    %239 = vmatprep.subr.bf16.mxu0 0
    %240 = vmatpush1.bf16.msra.mxu0 %v209
    %241 = vmatprep.subr.bf16.mxu0 0
    %242 = vmatpush2.bf16.msra.mxu0 0
    %243 = vmatprep.subr.bf16.mxu0 0
    %244 = vmatpush2.bf16.msra.mxu0 0
    %245 = vmatprep.subr.bf16.mxu0 0
    %246 = vmatpush2.bf16.msra.mxu0 0
    %247 = vmatprep.subr.bf16.mxu0 0
    %248 = vmatpush2.bf16.msra.mxu0 0
    %249 = vmatprep.subr.bf16.mxu0 0
    %250 = vmatpush2.bf16.msra.mxu0 0
    %251 = vmatprep.subr.bf16.mxu0 0
    %252 = vmatpush2.bf16.msra.mxu0 0
    %253 = vmatprep.subr.bf16.mxu0 0
    %254 = vmatpush2.bf16.msra.mxu0 0
    %255 = vmatprep.subr.bf16.mxu0 0
    %256 = vmatpush2.bf16.msra.mxu0 0
    %257 = vmatprep.mubr.bf16.mxu0 0
    %258 = vmatmul.mubr.bf16.gmra.mxu0 %v156
    %v259 = vpop.f32.mrf.mxu0
    %v260 = vadd.f32 %v176, %v259
    %v261 = vpop.f32.mrf.mxu0
    %v262 = vpop.f32.mrf.mxu0
    %v263 = vadd.f32 %v176, %v262
    %v264 = vpop.f32.mrf.mxu0
    %265 = vdwg.mxu0
    %v266 = vmax.f32 %v260, 0.0
    %v267 = vmax.f32 %v263, 0.0
    %v268 = vpack.c.bf16 %v267, %v266
    %s269 = scalar_lea.vmem [#allocation7], 64
    %v270 = vld [vmem:[%s269] sm:$0xf]
    %v271 = vld [vmem:[%s269 + $0x4] sm:$0xf]
    %v272 = vld [vmem:[%s269 + $0x8] sm:$0xf]
    %v273 = vld [vmem:[%s269 + $0xc] sm:$0xf]
    %v274 = vld [vmem:[%s269 + $0x10] sm:$0xf]
    %v275 = vld [vmem:[%s269 + $0x14] sm:$0xf]
    %v276 = vld [vmem:[%s269 + $0x18] sm:$0xf]
    %v277 = vld [vmem:[%s269 + $0x1c] sm:$0xf]
    %v278 = vld [vmem:[%s269 + $0x20] sm:$0xf]
    %v279 = vld [vmem:[%s269 + $0x24] sm:$0xf]
    %v280 = vld [vmem:[%s269 + $0x28] sm:$0xf]
    %v281 = vld [vmem:[%s269 + $0x2c] sm:$0xf]
    %v282 = vld [vmem:[%s269 + $0x30] sm:$0xf]
    %v283 = vld [vmem:[%s269 + $0x34] sm:$0xf]
    %v284 = vld [vmem:[%s269 + $0x38] sm:$0xf]
    %v285 = vld [vmem:[%s269 + $0x3c] sm:$0xf]
    %v286 = vlaneseq
    %v287 = vshrl.u32 %v286, 7
    %v288 = vsub.s32 2, %v287
    %v289 = vrot.slane %v80, %v288
    %v306 = vunpack.c.l.b16 %v270
    %v307 = vunpack.c.l.b16 %v271
    %v308 = vunpack.c.l.b16 %v272
    %v309 = vunpack.c.l.b16 %v273
    %v310 = vunpack.c.l.b16 %v274
    %v311 = vunpack.c.l.b16 %v275
    %v312 = vunpack.c.l.b16 %v276
    %v313 = vunpack.c.l.b16 %v277
    %v314 = vunpack.c.l.b16 %v278
    %v315 = vunpack.c.l.b16 %v279
    %v316 = vunpack.c.l.b16 %v280
    %v317 = vunpack.c.l.b16 %v281
    %v318 = vunpack.c.l.b16 %v282
    %v319 = vunpack.c.l.b16 %v283
    %v320 = vunpack.c.l.b16 %v284
    %v321 = vunpack.c.l.b16 %v285
    %v322 = vpack.c.b16 %v307, %v306
    %v323 = vpack.c.b16 %v309, %v308
    %v324 = vpack.c.b16 %v311, %v310
    %v325 = vpack.c.b16 %v313, %v312
    %v326 = vpack.c.b16 %v315, %v314
    %v327 = vpack.c.b16 %v317, %v316
    %v328 = vpack.c.b16 %v319, %v318
    %v329 = vpack.c.b16 %v321, %v320
    %338 = vmatprep.subr.bf16.mxu0 0
    %339 = vmatpush1.bf16.msra.mxu0 %v329
    %340 = vmatprep.subr.bf16.mxu0 0
    %341 = vmatpush1.bf16.msra.mxu0 %v328
    %342 = vmatprep.subr.bf16.mxu0 0
    %343 = vmatpush1.bf16.msra.mxu0 %v327
    %344 = vmatprep.subr.bf16.mxu0 0
    %345 = vmatpush1.bf16.msra.mxu0 %v326
    %346 = vmatprep.subr.bf16.mxu0 0
    %347 = vmatpush1.bf16.msra.mxu0 %v325
    %348 = vmatprep.subr.bf16.mxu0 0
    %349 = vmatpush1.bf16.msra.mxu0 %v324
    %350 = vmatprep.subr.bf16.mxu0 0
    %351 = vmatpush1.bf16.msra.mxu0 %v323
    %352 = vmatprep.subr.bf16.mxu0 0
    %353 = vmatpush1.bf16.msra.mxu0 %v322
    %354 = vmatprep.subr.bf16.mxu0 0
    %355 = vmatpush2.bf16.msra.mxu0 0
    %356 = vmatprep.subr.bf16.mxu0 0
    %357 = vmatpush2.bf16.msra.mxu0 0
    %358 = vmatprep.subr.bf16.mxu0 0
    %359 = vmatpush2.bf16.msra.mxu0 0
    %360 = vmatprep.subr.bf16.mxu0 0
    %361 = vmatpush2.bf16.msra.mxu0 0
    %362 = vmatprep.subr.bf16.mxu0 0
    %363 = vmatpush2.bf16.msra.mxu0 0
    %364 = vmatprep.subr.bf16.mxu0 0
    %365 = vmatpush2.bf16.msra.mxu0 0
    %366 = vmatprep.subr.bf16.mxu0 0
    %367 = vmatpush2.bf16.msra.mxu0 0
    %368 = vmatprep.subr.bf16.mxu0 0
    %369 = vmatpush2.bf16.msra.mxu0 0
    %370 = vmatprep.mubr.bf16.mxu0 0
    %371 = vmatmul.mubr.bf16.gmra.mxu0 %v268
    %v372 = vpop.f32.mrf.mxu0
    %v373 = vadd.f32 %v289, %v372
    %v374 = vpop.f32.mrf.mxu0
    %v375 = vpop.f32.mrf.mxu0
    %v376 = vadd.f32 %v289, %v375
    %v377 = vpop.f32.mrf.mxu0
    %378 = vdwg.mxu0
    %v379 = vunpack.c.l.bf16 %v156
    %v380 = vunpack.c.h.bf16 %v156
    %v381 = vadd.f32 %v373, %v379
    %v382 = vadd.f32 %v376, %v380
    %v383 = vmax.f32 %v381, 0.0
    %v384 = vmax.f32 %v382, 0.0
    %v385 = vpack.c.bf16 %v384, %v383
    %s386 = scalar_lea.vmem [#allocation7], 128
    %v387 = vld [vmem:[%s386] sm:$0xf]
    %v388 = vld [vmem:[%s386 + $0x4] sm:$0xf]
    %v389 = vld [vmem:[%s386 + $0x8] sm:$0xf]
    %v390 = vld [vmem:[%s386 + $0xc] sm:$0xf]
    %v391 = vld [vmem:[%s386 + $0x10] sm:$0xf]
    %v392 = vld [vmem:[%s386 + $0x14] sm:$0xf]
    %v393 = vld [vmem:[%s386 + $0x18] sm:$0xf]
    %v394 = vld [vmem:[%s386 + $0x1c] sm:$0xf]
    %v395 = vld [vmem:[%s386 + $0x20] sm:$0xf]
    %v396 = vld [vmem:[%s386 + $0x24] sm:$0xf]
    %v397 = vld [vmem:[%s386 + $0x28] sm:$0xf]
    %v398 = vld [vmem:[%s386 + $0x2c] sm:$0xf]
    %v399 = vld [vmem:[%s386 + $0x30] sm:$0xf]
    %v400 = vld [vmem:[%s386 + $0x34] sm:$0xf]
    %v401 = vld [vmem:[%s386 + $0x38] sm:$0xf]
    %v402 = vld [vmem:[%s386 + $0x3c] sm:$0xf]
    %v403 = vlaneseq
    %v404 = vshrl.u32 %v403, 7
    %v405 = vsub.s32 3, %v404
    %v406 = vrot.slane %v80, %v405
    %v423 = vunpack.c.l.b16 %v387
    %v424 = vunpack.c.l.b16 %v388
    %v425 = vunpack.c.l.b16 %v389
    %v426 = vunpack.c.l.b16 %v390
    %v427 = vunpack.c.l.b16 %v391
    %v428 = vunpack.c.l.b16 %v392
    %v429 = vunpack.c.l.b16 %v393
    %v430 = vunpack.c.l.b16 %v394
    %v431 = vunpack.c.l.b16 %v395
    %v432 = vunpack.c.l.b16 %v396
    %v433 = vunpack.c.l.b16 %v397
    %v434 = vunpack.c.l.b16 %v398
    %v435 = vunpack.c.l.b16 %v399
    %v436 = vunpack.c.l.b16 %v400
    %v437 = vunpack.c.l.b16 %v401
    %v438 = vunpack.c.l.b16 %v402
    %v439 = vpack.c.b16 %v424, %v423
    %v440 = vpack.c.b16 %v426, %v425
    %v441 = vpack.c.b16 %v428, %v427
    %v442 = vpack.c.b16 %v430, %v429
    %v443 = vpack.c.b16 %v432, %v431
    %v444 = vpack.c.b16 %v434, %v433
    %v445 = vpack.c.b16 %v436, %v435
    %v446 = vpack.c.b16 %v438, %v437
    %455 = vmatprep.subr.bf16.mxu0 0
    %456 = vmatpush1.bf16.msra.mxu0 %v446
    %457 = vmatprep.subr.bf16.mxu0 0
    %458 = vmatpush1.bf16.msra.mxu0 %v445
    %459 = vmatprep.subr.bf16.mxu0 0
    %460 = vmatpush1.bf16.msra.mxu0 %v444
    %461 = vmatprep.subr.bf16.mxu0 0
    %462 = vmatpush1.bf16.msra.mxu0 %v443
    %463 = vmatprep.subr.bf16.mxu0 0
    %464 = vmatpush1.bf16.msra.mxu0 %v442
    %465 = vmatprep.subr.bf16.mxu0 0
    %466 = vmatpush1.bf16.msra.mxu0 %v441
    %467 = vmatprep.subr.bf16.mxu0 0
    %468 = vmatpush1.bf16.msra.mxu0 %v440
    %469 = vmatprep.subr.bf16.mxu0 0
    %470 = vmatpush1.bf16.msra.mxu0 %v439
    %471 = vmatprep.subr.bf16.mxu0 0
    %472 = vmatpush2.bf16.msra.mxu0 0
    %473 = vmatprep.subr.bf16.mxu0 0
    %474 = vmatpush2.bf16.msra.mxu0 0
    %475 = vmatprep.subr.bf16.mxu0 0
    %476 = vmatpush2.bf16.msra.mxu0 0
    %477 = vmatprep.subr.bf16.mxu0 0
    %478 = vmatpush2.bf16.msra.mxu0 0
    %479 = vmatprep.subr.bf16.mxu0 0
    %480 = vmatpush2.bf16.msra.mxu0 0
    %481 = vmatprep.subr.bf16.mxu0 0
    %482 = vmatpush2.bf16.msra.mxu0 0
    %483 = vmatprep.subr.bf16.mxu0 0
    %484 = vmatpush2.bf16.msra.mxu0 0
    %485 = vmatprep.subr.bf16.mxu0 0
    %486 = vmatpush2.bf16.msra.mxu0 0
    %487 = vmatprep.mubr.bf16.mxu0 0
    %488 = vmatmul.mubr.bf16.gmra.mxu0 %v385
    %v489 = vpop.f32.mrf.mxu0
    %v490 = vadd.f32 %v406, %v489
    %v491 = vpop.f32.mrf.mxu0
    %v492 = vpop.f32.mrf.mxu0
    %v493 = vadd.f32 %v406, %v492
    %v494 = vpop.f32.mrf.mxu0
    %495 = vdwg.mxu0
    %v496 = vmax.f32 %v490, 0.0
    %v497 = vmax.f32 %v493, 0.0
    %v498 = vpack.c.bf16 %v497, %v496
    %s499 = scalar_lea.vmem [#allocation7], 192
    %v500 = vld [vmem:[%s499] sm:$0xf]
    %v501 = vld [vmem:[%s499 + $0x4] sm:$0xf]
    %v502 = vld [vmem:[%s499 + $0x8] sm:$0xf]
    %v503 = vld [vmem:[%s499 + $0xc] sm:$0xf]
    %v504 = vld [vmem:[%s499 + $0x10] sm:$0xf]
    %v505 = vld [vmem:[%s499 + $0x14] sm:$0xf]
    %v506 = vld [vmem:[%s499 + $0x18] sm:$0xf]
    %v507 = vld [vmem:[%s499 + $0x1c] sm:$0xf]
    %v508 = vld [vmem:[%s499 + $0x20] sm:$0xf]
    %v509 = vld [vmem:[%s499 + $0x24] sm:$0xf]
    %v510 = vld [vmem:[%s499 + $0x28] sm:$0xf]
    %v511 = vld [vmem:[%s499 + $0x2c] sm:$0xf]
    %v512 = vld [vmem:[%s499 + $0x30] sm:$0xf]
    %v513 = vld [vmem:[%s499 + $0x34] sm:$0xf]
    %v514 = vld [vmem:[%s499 + $0x38] sm:$0xf]
    %v515 = vld [vmem:[%s499 + $0x3c] sm:$0xf]
    %v516 = vlaneseq
    %v517 = vshrl.u32 %v516, 7
    %v518 = vsub.s32 4, %v517
    %v519 = vrot.slane %v80, %v518
    %v536 = vunpack.c.l.b16 %v500
    %v537 = vunpack.c.l.b16 %v501
    %v538 = vunpack.c.l.b16 %v502
    %v539 = vunpack.c.l.b16 %v503
    %v540 = vunpack.c.l.b16 %v504
    %v541 = vunpack.c.l.b16 %v505
    %v542 = vunpack.c.l.b16 %v506
    %v543 = vunpack.c.l.b16 %v507
    %v544 = vunpack.c.l.b16 %v508
    %v545 = vunpack.c.l.b16 %v509
    %v546 = vunpack.c.l.b16 %v510
    %v547 = vunpack.c.l.b16 %v511
    %v548 = vunpack.c.l.b16 %v512
    %v549 = vunpack.c.l.b16 %v513
    %v550 = vunpack.c.l.b16 %v514
    %v551 = vunpack.c.l.b16 %v515
    %v552 = vpack.c.b16 %v537, %v536
    %v553 = vpack.c.b16 %v539, %v538
    %v554 = vpack.c.b16 %v541, %v540
    %v555 = vpack.c.b16 %v543, %v542
    %v556 = vpack.c.b16 %v545, %v544
    %v557 = vpack.c.b16 %v547, %v546
    %v558 = vpack.c.b16 %v549, %v548
    %v559 = vpack.c.b16 %v551, %v550
    %568 = vmatprep.subr.bf16.mxu0 0
    %569 = vmatpush1.bf16.msra.mxu0 %v559
    %570 = vmatprep.subr.bf16.mxu0 0
    %571 = vmatpush1.bf16.msra.mxu0 %v558
    %572 = vmatprep.subr.bf16.mxu0 0
    %573 = vmatpush1.bf16.msra.mxu0 %v557
    %574 = vmatprep.subr.bf16.mxu0 0
    %575 = vmatpush1.bf16.msra.mxu0 %v556
    %576 = vmatprep.subr.bf16.mxu0 0
    %577 = vmatpush1.bf16.msra.mxu0 %v555
    %578 = vmatprep.subr.bf16.mxu0 0
    %579 = vmatpush1.bf16.msra.mxu0 %v554
    %580 = vmatprep.subr.bf16.mxu0 0
    %581 = vmatpush1.bf16.msra.mxu0 %v553
    %582 = vmatprep.subr.bf16.mxu0 0
    %583 = vmatpush1.bf16.msra.mxu0 %v552
    %584 = vmatprep.subr.bf16.mxu0 0
    %585 = vmatpush2.bf16.msra.mxu0 0
    %586 = vmatprep.subr.bf16.mxu0 0
    %587 = vmatpush2.bf16.msra.mxu0 0
    %588 = vmatprep.subr.bf16.mxu0 0
    %589 = vmatpush2.bf16.msra.mxu0 0
    %590 = vmatprep.subr.bf16.mxu0 0
    %591 = vmatpush2.bf16.msra.mxu0 0
    %592 = vmatprep.subr.bf16.mxu0 0
    %593 = vmatpush2.bf16.msra.mxu0 0
    %594 = vmatprep.subr.bf16.mxu0 0
    %595 = vmatpush2.bf16.msra.mxu0 0
    %596 = vmatprep.subr.bf16.mxu0 0
    %597 = vmatpush2.bf16.msra.mxu0 0
    %598 = vmatprep.subr.bf16.mxu0 0
    %599 = vmatpush2.bf16.msra.mxu0 0
    %600 = vmatprep.mubr.bf16.mxu0 0
    %601 = vmatmul.mubr.bf16.gmra.mxu0 %v498
    %v602 = vpop.f32.mrf.mxu0
    %v603 = vadd.f32 %v519, %v602
    %v604 = vpop.f32.mrf.mxu0
    %v605 = vpop.f32.mrf.mxu0
    %v606 = vadd.f32 %v519, %v605
    %v607 = vpop.f32.mrf.mxu0
    %608 = vdwg.mxu0
    %v609 = vunpack.c.l.bf16 %v385
    %v610 = vunpack.c.h.bf16 %v385
    %v611 = vadd.f32 %v603, %v609
    %v612 = vadd.f32 %v606, %v610
    %v613 = vmax.f32 %v611, 0.0
    %v614 = vmax.f32 %v612, 0.0
    %v615 = vpack.c.bf16 %v614, %v613
    %s616 = scalar_lea.vmem [#allocation7], 256
    %v617 = vld [vmem:[%s616] sm:$0xf]
    %v618 = vld [vmem:[%s616 + $0x4] sm:$0xf]
    %v619 = vld [vmem:[%s616 + $0x8] sm:$0xf]
    %v620 = vld [vmem:[%s616 + $0xc] sm:$0xf]
    %v621 = vld [vmem:[%s616 + $0x10] sm:$0xf]
    %v622 = vld [vmem:[%s616 + $0x14] sm:$0xf]
    %v623 = vld [vmem:[%s616 + $0x18] sm:$0xf]
    %v624 = vld [vmem:[%s616 + $0x1c] sm:$0xf]
    %v625 = vld [vmem:[%s616 + $0x20] sm:$0xf]
    %v626 = vld [vmem:[%s616 + $0x24] sm:$0xf]
    %v627 = vld [vmem:[%s616 + $0x28] sm:$0xf]
    %v628 = vld [vmem:[%s616 + $0x2c] sm:$0xf]
    %v629 = vld [vmem:[%s616 + $0x30] sm:$0xf]
    %v630 = vld [vmem:[%s616 + $0x34] sm:$0xf]
    %v631 = vld [vmem:[%s616 + $0x38] sm:$0xf]
    %v632 = vld [vmem:[%s616 + $0x3c] sm:$0xf]
    %v633 = vlaneseq
    %v634 = vshrl.u32 %v633, 7
    %v635 = vsub.s32 5, %v634
    %v636 = vrot.slane %v80, %v635
    %v653 = vunpack.c.l.b16 %v617
    %v654 = vunpack.c.l.b16 %v618
    %v655 = vunpack.c.l.b16 %v619
    %v656 = vunpack.c.l.b16 %v620
    %v657 = vunpack.c.l.b16 %v621
    %v658 = vunpack.c.l.b16 %v622
    %v659 = vunpack.c.l.b16 %v623
    %v660 = vunpack.c.l.b16 %v624
    %v661 = vunpack.c.l.b16 %v625
    %v662 = vunpack.c.l.b16 %v626
    %v663 = vunpack.c.l.b16 %v627
    %v664 = vunpack.c.l.b16 %v628
    %v665 = vunpack.c.l.b16 %v629
    %v666 = vunpack.c.l.b16 %v630
    %v667 = vunpack.c.l.b16 %v631
    %v668 = vunpack.c.l.b16 %v632
    %v669 = vpack.c.b16 %v654, %v653
    %v670 = vpack.c.b16 %v656, %v655
    %v671 = vpack.c.b16 %v658, %v657
    %v672 = vpack.c.b16 %v660, %v659
    %v673 = vpack.c.b16 %v662, %v661
    %v674 = vpack.c.b16 %v664, %v663
    %v675 = vpack.c.b16 %v666, %v665
    %v676 = vpack.c.b16 %v668, %v667
    %685 = vmatprep.subr.bf16.mxu0 0
    %686 = vmatpush1.bf16.msra.mxu0 %v676
    %687 = vmatprep.subr.bf16.mxu0 0
    %688 = vmatpush1.bf16.msra.mxu0 %v675
    %689 = vmatprep.subr.bf16.mxu0 0
    %690 = vmatpush1.bf16.msra.mxu0 %v674
    %691 = vmatprep.subr.bf16.mxu0 0
    %692 = vmatpush1.bf16.msra.mxu0 %v673
    %693 = vmatprep.subr.bf16.mxu0 0
    %694 = vmatpush1.bf16.msra.mxu0 %v672
    %695 = vmatprep.subr.bf16.mxu0 0
    %696 = vmatpush1.bf16.msra.mxu0 %v671
    %697 = vmatprep.subr.bf16.mxu0 0
    %698 = vmatpush1.bf16.msra.mxu0 %v670
    %699 = vmatprep.subr.bf16.mxu0 0
    %700 = vmatpush1.bf16.msra.mxu0 %v669
    %701 = vmatprep.subr.bf16.mxu0 0
    %702 = vmatpush2.bf16.msra.mxu0 0
    %703 = vmatprep.subr.bf16.mxu0 0
    %704 = vmatpush2.bf16.msra.mxu0 0
    %705 = vmatprep.subr.bf16.mxu0 0
    %706 = vmatpush2.bf16.msra.mxu0 0
    %707 = vmatprep.subr.bf16.mxu0 0
    %708 = vmatpush2.bf16.msra.mxu0 0
    %709 = vmatprep.subr.bf16.mxu0 0
    %710 = vmatpush2.bf16.msra.mxu0 0
    %711 = vmatprep.subr.bf16.mxu0 0
    %712 = vmatpush2.bf16.msra.mxu0 0
    %713 = vmatprep.subr.bf16.mxu0 0
    %714 = vmatpush2.bf16.msra.mxu0 0
    %715 = vmatprep.subr.bf16.mxu0 0
    %716 = vmatpush2.bf16.msra.mxu0 0
    %717 = vmatprep.mubr.bf16.mxu0 0
    %718 = vmatmul.mubr.bf16.gmra.mxu0 %v615
    %v719 = vpop.f32.mrf.mxu0
    %v720 = vadd.f32 %v636, %v719
    %v721 = vpop.f32.mrf.mxu0
    %v722 = vpop.f32.mrf.mxu0
    %v723 = vadd.f32 %v636, %v722
    %v724 = vpop.f32.mrf.mxu0
    %725 = vdwg.mxu0
    %v726 = vmax.f32 %v720, 0.0
    %v727 = vmax.f32 %v723, 0.0
    %v728 = vpack.c.bf16 %v727, %v726
    %s729 = scalar_lea.vmem [#allocation7], 320
    %v730 = vld [vmem:[%s729] sm:$0xf]
    %v731 = vld [vmem:[%s729 + $0x4] sm:$0xf]
    %v732 = vld [vmem:[%s729 + $0x8] sm:$0xf]
    %v733 = vld [vmem:[%s729 + $0xc] sm:$0xf]
    %v734 = vld [vmem:[%s729 + $0x10] sm:$0xf]
    %v735 = vld [vmem:[%s729 + $0x14] sm:$0xf]
    %v736 = vld [vmem:[%s729 + $0x18] sm:$0xf]
    %v737 = vld [vmem:[%s729 + $0x1c] sm:$0xf]
    %v738 = vld [vmem:[%s729 + $0x20] sm:$0xf]
    %v739 = vld [vmem:[%s729 + $0x24] sm:$0xf]
    %v740 = vld [vmem:[%s729 + $0x28] sm:$0xf]
    %v741 = vld [vmem:[%s729 + $0x2c] sm:$0xf]
    %v742 = vld [vmem:[%s729 + $0x30] sm:$0xf]
    %v743 = vld [vmem:[%s729 + $0x34] sm:$0xf]
    %v744 = vld [vmem:[%s729 + $0x38] sm:$0xf]
    %v745 = vld [vmem:[%s729 + $0x3c] sm:$0xf]
    %v746 = vlaneseq
    %v747 = vshrl.u32 %v746, 7
    %v748 = vsub.s32 6, %v747
    %v749 = vrot.slane %v80, %v748
    %v766 = vunpack.c.l.b16 %v730
    %v767 = vunpack.c.l.b16 %v731
    %v768 = vunpack.c.l.b16 %v732
    %v769 = vunpack.c.l.b16 %v733
    %v770 = vunpack.c.l.b16 %v734
    %v771 = vunpack.c.l.b16 %v735
    %v772 = vunpack.c.l.b16 %v736
    %v773 = vunpack.c.l.b16 %v737
    %v774 = vunpack.c.l.b16 %v738
    %v775 = vunpack.c.l.b16 %v739
    %v776 = vunpack.c.l.b16 %v740
    %v777 = vunpack.c.l.b16 %v741
    %v778 = vunpack.c.l.b16 %v742
    %v779 = vunpack.c.l.b16 %v743
    %v780 = vunpack.c.l.b16 %v744
    %v781 = vunpack.c.l.b16 %v745
    %v782 = vpack.c.b16 %v767, %v766
    %v783 = vpack.c.b16 %v769, %v768
    %v784 = vpack.c.b16 %v771, %v770
    %v785 = vpack.c.b16 %v773, %v772
    %v786 = vpack.c.b16 %v775, %v774
    %v787 = vpack.c.b16 %v777, %v776
    %v788 = vpack.c.b16 %v779, %v778
    %v789 = vpack.c.b16 %v781, %v780
    %798 = vmatprep.subr.bf16.mxu0 0
    %799 = vmatpush1.bf16.msra.mxu0 %v789
    %800 = vmatprep.subr.bf16.mxu0 0
    %801 = vmatpush1.bf16.msra.mxu0 %v788
    %802 = vmatprep.subr.bf16.mxu0 0
    %803 = vmatpush1.bf16.msra.mxu0 %v787
    %804 = vmatprep.subr.bf16.mxu0 0
    %805 = vmatpush1.bf16.msra.mxu0 %v786
    %806 = vmatprep.subr.bf16.mxu0 0
    %807 = vmatpush1.bf16.msra.mxu0 %v785
    %808 = vmatprep.subr.bf16.mxu0 0
    %809 = vmatpush1.bf16.msra.mxu0 %v784
    %810 = vmatprep.subr.bf16.mxu0 0
    %811 = vmatpush1.bf16.msra.mxu0 %v783
    %812 = vmatprep.subr.bf16.mxu0 0
    %813 = vmatpush1.bf16.msra.mxu0 %v782
    %814 = vmatprep.subr.bf16.mxu0 0
    %815 = vmatpush2.bf16.msra.mxu0 0
    %816 = vmatprep.subr.bf16.mxu0 0
    %817 = vmatpush2.bf16.msra.mxu0 0
    %818 = vmatprep.subr.bf16.mxu0 0
    %819 = vmatpush2.bf16.msra.mxu0 0
    %820 = vmatprep.subr.bf16.mxu0 0
    %821 = vmatpush2.bf16.msra.mxu0 0
    %822 = vmatprep.subr.bf16.mxu0 0
    %823 = vmatpush2.bf16.msra.mxu0 0
    %824 = vmatprep.subr.bf16.mxu0 0
    %825 = vmatpush2.bf16.msra.mxu0 0
    %826 = vmatprep.subr.bf16.mxu0 0
    %827 = vmatpush2.bf16.msra.mxu0 0
    %828 = vmatprep.subr.bf16.mxu0 0
    %829 = vmatpush2.bf16.msra.mxu0 0
    %830 = vmatprep.mubr.bf16.mxu0 0
    %831 = vmatmul.mubr.bf16.gmra.mxu0 %v728
    %v832 = vpop.f32.mrf.mxu0
    %v833 = vadd.f32 %v749, %v832
    %v834 = vpop.f32.mrf.mxu0
    %v835 = vpop.f32.mrf.mxu0
    %v836 = vadd.f32 %v749, %v835
    %v837 = vpop.f32.mrf.mxu0
    %838 = vdwg.mxu0
    %v839 = vunpack.c.l.bf16 %v615
    %v840 = vunpack.c.h.bf16 %v615
    %v841 = vadd.f32 %v833, %v839
    %v842 = vadd.f32 %v836, %v840
    %v843 = vmax.f32 %v841, 0.0
    %v844 = vmax.f32 %v842, 0.0
    %v845 = vpack.c.bf16 %v844, %v843
    %s846 = scalar_lea.vmem [#allocation7], 384
    %v847 = vld [vmem:[%s846] sm:$0xf]
    %v848 = vld [vmem:[%s846 + $0x4] sm:$0xf]
    %v849 = vld [vmem:[%s846 + $0x8] sm:$0xf]
    %v850 = vld [vmem:[%s846 + $0xc] sm:$0xf]
    %v851 = vld [vmem:[%s846 + $0x10] sm:$0xf]
    %v852 = vld [vmem:[%s846 + $0x14] sm:$0xf]
    %v853 = vld [vmem:[%s846 + $0x18] sm:$0xf]
    %v854 = vld [vmem:[%s846 + $0x1c] sm:$0xf]
    %v855 = vld [vmem:[%s846 + $0x20] sm:$0xf]
    %v856 = vld [vmem:[%s846 + $0x24] sm:$0xf]
    %v857 = vld [vmem:[%s846 + $0x28] sm:$0xf]
    %v858 = vld [vmem:[%s846 + $0x2c] sm:$0xf]
    %v859 = vld [vmem:[%s846 + $0x30] sm:$0xf]
    %v860 = vld [vmem:[%s846 + $0x34] sm:$0xf]
    %v861 = vld [vmem:[%s846 + $0x38] sm:$0xf]
    %v862 = vld [vmem:[%s846 + $0x3c] sm:$0xf]
    %v863 = vlaneseq
    %v864 = vshrl.u32 %v863, 7
    %v865 = vsub.s32 7, %v864
    %v866 = vrot.slane %v80, %v865
    %v883 = vunpack.c.l.b16 %v847
    %v884 = vunpack.c.l.b16 %v848
    %v885 = vunpack.c.l.b16 %v849
    %v886 = vunpack.c.l.b16 %v850
    %v887 = vunpack.c.l.b16 %v851
    %v888 = vunpack.c.l.b16 %v852
    %v889 = vunpack.c.l.b16 %v853
    %v890 = vunpack.c.l.b16 %v854
    %v891 = vunpack.c.l.b16 %v855
    %v892 = vunpack.c.l.b16 %v856
    %v893 = vunpack.c.l.b16 %v857
    %v894 = vunpack.c.l.b16 %v858
    %v895 = vunpack.c.l.b16 %v859
    %v896 = vunpack.c.l.b16 %v860
    %v897 = vunpack.c.l.b16 %v861
    %v898 = vunpack.c.l.b16 %v862
    %v899 = vpack.c.b16 %v884, %v883
    %v900 = vpack.c.b16 %v886, %v885
    %v901 = vpack.c.b16 %v888, %v887
    %v902 = vpack.c.b16 %v890, %v889
    %v903 = vpack.c.b16 %v892, %v891
    %v904 = vpack.c.b16 %v894, %v893
    %v905 = vpack.c.b16 %v896, %v895
    %v906 = vpack.c.b16 %v898, %v897
    %915 = vmatprep.subr.bf16.mxu0 0
    %916 = vmatpush1.bf16.msra.mxu0 %v906
    %917 = vmatprep.subr.bf16.mxu0 0
    %918 = vmatpush1.bf16.msra.mxu0 %v905
    %919 = vmatprep.subr.bf16.mxu0 0
    %920 = vmatpush1.bf16.msra.mxu0 %v904
    %921 = vmatprep.subr.bf16.mxu0 0
    %922 = vmatpush1.bf16.msra.mxu0 %v903
    %923 = vmatprep.subr.bf16.mxu0 0
    %924 = vmatpush1.bf16.msra.mxu0 %v902
    %925 = vmatprep.subr.bf16.mxu0 0
    %926 = vmatpush1.bf16.msra.mxu0 %v901
    %927 = vmatprep.subr.bf16.mxu0 0
    %928 = vmatpush1.bf16.msra.mxu0 %v900
    %929 = vmatprep.subr.bf16.mxu0 0
    %930 = vmatpush1.bf16.msra.mxu0 %v899
    %931 = vmatprep.subr.bf16.mxu0 0
    %932 = vmatpush2.bf16.msra.mxu0 0
    %933 = vmatprep.subr.bf16.mxu0 0
    %934 = vmatpush2.bf16.msra.mxu0 0
    %935 = vmatprep.subr.bf16.mxu0 0
    %936 = vmatpush2.bf16.msra.mxu0 0
    %937 = vmatprep.subr.bf16.mxu0 0
    %938 = vmatpush2.bf16.msra.mxu0 0
    %939 = vmatprep.subr.bf16.mxu0 0
    %940 = vmatpush2.bf16.msra.mxu0 0
    %941 = vmatprep.subr.bf16.mxu0 0
    %942 = vmatpush2.bf16.msra.mxu0 0
    %943 = vmatprep.subr.bf16.mxu0 0
    %944 = vmatpush2.bf16.msra.mxu0 0
    %945 = vmatprep.subr.bf16.mxu0 0
    %946 = vmatpush2.bf16.msra.mxu0 0
    %947 = vmatprep.mubr.bf16.mxu0 0
    %948 = vmatmul.mubr.bf16.gmra.mxu0 %v845
    %v949 = vpop.f32.mrf.mxu0
    %v950 = vadd.f32 %v866, %v949
    %v951 = vpop.f32.mrf.mxu0
    %v952 = vpop.f32.mrf.mxu0
    %v953 = vadd.f32 %v866, %v952
    %v954 = vpop.f32.mrf.mxu0
    %955 = vdwg.mxu0
    %v956 = vmax.f32 %v950, -1.0
    %v957 = vmax.f32 %v953, -1.0
    %v958 = vmin.f32 %v956, 1.0
    %v959 = vmin.f32 %v957, 1.0
    %v960 = vmax.f32 %v950, 0.0
    %v961 = vmax.f32 %v953, 0.0
    %v962 = vpack.c.bf16 %v961, %v960
    %s963 = scalar_lea.vmem [#allocation7], 448
    %v964 = vld [vmem:[%s963] sm:$0xf]
    %v965 = vld [vmem:[%s963 + $0x4] sm:$0xf]
    %v966 = vld [vmem:[%s963 + $0x8] sm:$0xf]
    %v967 = vld [vmem:[%s963 + $0xc] sm:$0xf]
    %v968 = vld [vmem:[%s963 + $0x10] sm:$0xf]
    %v969 = vld [vmem:[%s963 + $0x14] sm:$0xf]
    %v970 = vld [vmem:[%s963 + $0x18] sm:$0xf]
    %v971 = vld [vmem:[%s963 + $0x1c] sm:$0xf]
    %v972 = vld [vmem:[%s963 + $0x20] sm:$0xf]
    %v973 = vld [vmem:[%s963 + $0x24] sm:$0xf]
    %v974 = vld [vmem:[%s963 + $0x28] sm:$0xf]
    %v975 = vld [vmem:[%s963 + $0x2c] sm:$0xf]
    %v976 = vld [vmem:[%s963 + $0x30] sm:$0xf]
    %v977 = vld [vmem:[%s963 + $0x34] sm:$0xf]
    %v978 = vld [vmem:[%s963 + $0x38] sm:$0xf]
    %v979 = vld [vmem:[%s963 + $0x3c] sm:$0xf]
    %v980 = vlaneseq
    %v981 = vshrl.u32 %v980, 7
    %v982 = vsub.s32 0, %v981
    %v983 = vrot.slane %v81, %v982
    %v1000 = vunpack.c.l.b16 %v964
    %v1001 = vunpack.c.l.b16 %v965
    %v1002 = vunpack.c.l.b16 %v966
    %v1003 = vunpack.c.l.b16 %v967
    %v1004 = vunpack.c.l.b16 %v968
    %v1005 = vunpack.c.l.b16 %v969
    %v1006 = vunpack.c.l.b16 %v970
    %v1007 = vunpack.c.l.b16 %v971
    %v1008 = vunpack.c.l.b16 %v972
    %v1009 = vunpack.c.l.b16 %v973
    %v1010 = vunpack.c.l.b16 %v974
    %v1011 = vunpack.c.l.b16 %v975
    %v1012 = vunpack.c.l.b16 %v976
    %v1013 = vunpack.c.l.b16 %v977
    %v1014 = vunpack.c.l.b16 %v978
    %v1015 = vunpack.c.l.b16 %v979
    %v1016 = vpack.c.b16 %v1001, %v1000
    %v1017 = vpack.c.b16 %v1003, %v1002
    %v1018 = vpack.c.b16 %v1005, %v1004
    %v1019 = vpack.c.b16 %v1007, %v1006
    %v1020 = vpack.c.b16 %v1009, %v1008
    %v1021 = vpack.c.b16 %v1011, %v1010
    %v1022 = vpack.c.b16 %v1013, %v1012
    %v1023 = vpack.c.b16 %v1015, %v1014
    %1032 = vmatprep.subr.bf16.mxu0 0
    %1033 = vmatpush1.bf16.msra.mxu0 %v1023
    %1034 = vmatprep.subr.bf16.mxu0 0
    %1035 = vmatpush1.bf16.msra.mxu0 %v1022
    %1036 = vmatprep.subr.bf16.mxu0 0
    %1037 = vmatpush1.bf16.msra.mxu0 %v1021
    %1038 = vmatprep.subr.bf16.mxu0 0
    %1039 = vmatpush1.bf16.msra.mxu0 %v1020
    %1040 = vmatprep.subr.bf16.mxu0 0
    %1041 = vmatpush1.bf16.msra.mxu0 %v1019
    %1042 = vmatprep.subr.bf16.mxu0 0
    %1043 = vmatpush1.bf16.msra.mxu0 %v1018
    %1044 = vmatprep.subr.bf16.mxu0 0
    %1045 = vmatpush1.bf16.msra.mxu0 %v1017
    %1046 = vmatprep.subr.bf16.mxu0 0
    %1047 = vmatpush1.bf16.msra.mxu0 %v1016
    %1048 = vmatprep.subr.bf16.mxu0 0
    %1049 = vmatpush2.bf16.msra.mxu0 0
    %1050 = vmatprep.subr.bf16.mxu0 0
    %1051 = vmatpush2.bf16.msra.mxu0 0
    %1052 = vmatprep.subr.bf16.mxu0 0
    %1053 = vmatpush2.bf16.msra.mxu0 0
    %1054 = vmatprep.subr.bf16.mxu0 0
    %1055 = vmatpush2.bf16.msra.mxu0 0
    %1056 = vmatprep.subr.bf16.mxu0 0
    %1057 = vmatpush2.bf16.msra.mxu0 0
    %1058 = vmatprep.subr.bf16.mxu0 0
    %1059 = vmatpush2.bf16.msra.mxu0 0
    %1060 = vmatprep.subr.bf16.mxu0 0
    %1061 = vmatpush2.bf16.msra.mxu0 0
    %1062 = vmatprep.subr.bf16.mxu0 0
    %1063 = vmatpush2.bf16.msra.mxu0 0
    %1064 = vmatprep.mubr.bf16.mxu0 0
    %1065 = vmatmul.mubr.bf16.gmra.mxu0 %v962
    %v1066 = vpop.f32.mrf.mxu0
    %v1067 = vadd.f32 %v983, %v1066
    %v1068 = vpop.f32.mrf.mxu0
    %v1069 = vpop.f32.mrf.mxu0
    %v1070 = vadd.f32 %v983, %v1069
    %v1071 = vpop.f32.mrf.mxu0
    %1072 = vdwg.mxu0
    %v1073 = vmax.f32 %v1067, 0.0
    %v1074 = vmax.f32 %v1070, 0.0
    %v1075 = vpack.c.bf16 %v1074, %v1073
    %s1076 = scalar_lea.vmem [#allocation7], 512
    %v1077 = vld [vmem:[%s1076] sm:$0xf]
    %v1078 = vld [vmem:[%s1076 + $0x4] sm:$0xf]
    %v1079 = vld [vmem:[%s1076 + $0x8] sm:$0xf]
    %v1080 = vld [vmem:[%s1076 + $0xc] sm:$0xf]
    %v1081 = vld [vmem:[%s1076 + $0x10] sm:$0xf]
    %v1082 = vld [vmem:[%s1076 + $0x14] sm:$0xf]
    %v1083 = vld [vmem:[%s1076 + $0x18] sm:$0xf]
    %v1084 = vld [vmem:[%s1076 + $0x1c] sm:$0xf]
    %v1085 = vld [vmem:[%s1076 + $0x20] sm:$0xf]
    %v1086 = vld [vmem:[%s1076 + $0x24] sm:$0xf]
    %v1087 = vld [vmem:[%s1076 + $0x28] sm:$0xf]
    %v1088 = vld [vmem:[%s1076 + $0x2c] sm:$0xf]
    %v1089 = vld [vmem:[%s1076 + $0x30] sm:$0xf]
    %v1090 = vld [vmem:[%s1076 + $0x34] sm:$0xf]
    %v1091 = vld [vmem:[%s1076 + $0x38] sm:$0xf]
    %v1092 = vld [vmem:[%s1076 + $0x3c] sm:$0xf]
    %v1093 = vlaneseq
    %v1094 = vshrl.u32 %v1093, 7
    %v1095 = vsub.s32 1, %v1094
    %v1096 = vrot.slane %v81, %v1095
    %v1113 = vunpack.c.l.b16 %v1077
    %v1114 = vunpack.c.l.b16 %v1078
    %v1115 = vunpack.c.l.b16 %v1079
    %v1116 = vunpack.c.l.b16 %v1080
    %v1117 = vunpack.c.l.b16 %v1081
    %v1118 = vunpack.c.l.b16 %v1082
    %v1119 = vunpack.c.l.b16 %v1083
    %v1120 = vunpack.c.l.b16 %v1084
    %v1121 = vunpack.c.l.b16 %v1085
    %v1122 = vunpack.c.l.b16 %v1086
    %v1123 = vunpack.c.l.b16 %v1087
    %v1124 = vunpack.c.l.b16 %v1088
    %v1125 = vunpack.c.l.b16 %v1089
    %v1126 = vunpack.c.l.b16 %v1090
    %v1127 = vunpack.c.l.b16 %v1091
    %v1128 = vunpack.c.l.b16 %v1092
    %v1129 = vpack.c.b16 %v1114, %v1113
    %v1130 = vpack.c.b16 %v1116, %v1115
    %v1131 = vpack.c.b16 %v1118, %v1117
    %v1132 = vpack.c.b16 %v1120, %v1119
    %v1133 = vpack.c.b16 %v1122, %v1121
    %v1134 = vpack.c.b16 %v1124, %v1123
    %v1135 = vpack.c.b16 %v1126, %v1125
    %v1136 = vpack.c.b16 %v1128, %v1127
    %1145 = vmatprep.subr.bf16.mxu0 0
    %1146 = vmatpush1.bf16.msra.mxu0 %v1136
    %1147 = vmatprep.subr.bf16.mxu0 0
    %1148 = vmatpush1.bf16.msra.mxu0 %v1135
    %1149 = vmatprep.subr.bf16.mxu0 0
    %1150 = vmatpush1.bf16.msra.mxu0 %v1134
    %1151 = vmatprep.subr.bf16.mxu0 0
    %1152 = vmatpush1.bf16.msra.mxu0 %v1133
    %1153 = vmatprep.subr.bf16.mxu0 0
    %1154 = vmatpush1.bf16.msra.mxu0 %v1132
    %1155 = vmatprep.subr.bf16.mxu0 0
    %1156 = vmatpush1.bf16.msra.mxu0 %v1131
    %1157 = vmatprep.subr.bf16.mxu0 0
    %1158 = vmatpush1.bf16.msra.mxu0 %v1130
    %1159 = vmatprep.subr.bf16.mxu0 0
    %1160 = vmatpush1.bf16.msra.mxu0 %v1129
    %1161 = vmatprep.subr.bf16.mxu0 0
    %1162 = vmatpush2.bf16.msra.mxu0 0
    %1163 = vmatprep.subr.bf16.mxu0 0
    %1164 = vmatpush2.bf16.msra.mxu0 0
    %1165 = vmatprep.subr.bf16.mxu0 0
    %1166 = vmatpush2.bf16.msra.mxu0 0
    %1167 = vmatprep.subr.bf16.mxu0 0
    %1168 = vmatpush2.bf16.msra.mxu0 0
    %1169 = vmatprep.subr.bf16.mxu0 0
    %1170 = vmatpush2.bf16.msra.mxu0 0
    %1171 = vmatprep.subr.bf16.mxu0 0
    %1172 = vmatpush2.bf16.msra.mxu0 0
    %1173 = vmatprep.subr.bf16.mxu0 0
    %1174 = vmatpush2.bf16.msra.mxu0 0
    %1175 = vmatprep.subr.bf16.mxu0 0
    %1176 = vmatpush2.bf16.msra.mxu0 0
    %1177 = vmatprep.mubr.bf16.mxu0 0
    %1178 = vmatmul.mubr.bf16.gmra.mxu0 %v1075
    %v1179 = vpop.f32.mrf.mxu0
    %v1180 = vadd.f32 %v1096, %v1179
    %v1181 = vpop.f32.mrf.mxu0
    %v1182 = vpop.f32.mrf.mxu0
    %v1183 = vadd.f32 %v1096, %v1182
    %v1184 = vpop.f32.mrf.mxu0
    %1185 = vdwg.mxu0
    %v1186 = vtanh.pop %v1180
    %v1187 = vtanh.pop %v1183
    %v1188 = vlaneseq
    %v1189 = vand.u32 %v1188, 127
    %vm1190 = vcmp.lt.s32.totalorder %v1189, 9
    %v1191 = vsel %vm1190, %v958, %v1186
    %v1192 = vsel %vm1190, %v959, %v1187
    %vm1193 = vcmask 130048
    %1194 = vst.msk [vmem:[#allocation10] sm:$0xff] %vm1193, %v1191
    %1195 = vst.msk [vmem:[#allocation10 + $0x8] sm:$0xff] %vm1193, %v1192
    // Predicated region
    $region34: #{tpu_custom_call.1} parent=1 // pred_check
      _
    $region35: #{tpu_custom_call.1} parent=1 // pred_check_branch
      %1197 = sbr.rel (0) target = $region37
    $region36: #{tpu_custom_call.1} parent=1 // pred_region
      %s1199 = ssub.s32 256, 256
      %1200 = vsyncadd [#allocation4], %s1199
      %s1201 = sshll.u32 [#allocation10], 4
      %s1202 = int_to_ptr.vmem [resolvable:$true] %s1201
      %1207 = dma.vmem_to_hbm [thread:$0]  %s1202, 256, %s4, [#allocation4], 128, 128, 8
    $region37: #{tpu_custom_call.1} parent=1 // pred_fallthru
      _
    // Predicated region
    $region38: #{tpu_custom_call.1} parent=1 // pred_check
      _
    $region39: #{tpu_custom_call.1} parent=1 // pred_check_branch
      %1209 = sbr.rel (0) target = $region41
    $region40: #{tpu_custom_call.1} parent=1 // pred_region
      %1210 = dma.done [#allocation4], 256
    $region41: #{tpu_custom_call.1} parent=1 // pred_fallthru
      _
    %1211 = vsyncpa [#allocation3], 1
    %1212 = vsyncpa [#allocation6], 1
    %1213 = vsyncpa [#allocation9], 1
    %1214 = vsyncpa [#allocation4], 1

</llo_original>
